<compile_context>
chip_gen: v5e
topology: v5e:2x2
jax: 0.10.0
libtpu: 0.0.40
codegen_flags: <defaults>
</compile_context>

<pallas_src>
import functools

import jax
import jax.numpy as jnp
from jax.experimental import pallas as pl
from jax.experimental.pallas import tpu as pltpu


def _round_up(x, m):
    return ((x + m - 1) // m) * m


def ffn_kernel(x_ref, wf_ref, bf_ref, w2_ref, b2_ref, gamma_ref, beta_ref, o_ref):
    hid = o_ref.shape[-1]

    x = x_ref[...]                                               # (TILE_N, Din) bf16

    # Fused [res_proj | fc1] GEMM: one MXU pass sharing the LHS tile.
    z = jnp.dot(x, wf_ref[...],
                preferred_element_type=jnp.float32) + bf_ref[...]  # (TILE_N, 2*hid) f32
    residual = z[:, :hid]
    h = jnp.maximum(z[:, hid:], 0.0)                              # ReLU(fc1(x))

    # TODO(synk): nn.Dropout is identity in eval mode; training-mode stochastic
    # dropout (pltpu.prng_*) intentionally omitted.

    # fc2: bf16 inputs, f32 accumulate.
    h = jnp.dot(h.astype(jnp.bfloat16), w2_ref[...],
                preferred_element_type=jnp.float32) + b2_ref[...]  # (TILE_N, hid) f32

    # LayerNorm(h + residual), eps=1e-5, one-pass statistics (single lane-reduce
    # pass over y and one over y*y instead of two mean passes).
    y = h + residual
    inv_hid = jnp.float32(1.0 / hid)
    s = jnp.sum(y, axis=-1, keepdims=True)
    sq = jnp.sum(y * y, axis=-1, keepdims=True)
    mean = s * inv_hid
    var = sq * inv_hid - mean * mean
    y = (y - mean) * jax.lax.rsqrt(var + 1e-5)
    o_ref[...] = y * gamma_ref[...] + beta_ref[...]


def _vmem_budget_bytes(tile_n, din, hid):
    # 2x double-buffered x tile (bf16) + 2x out tile (f32) + resident weights
    # (bf16) + biases/affine (f32) + rough allowance for f32 intermediates.
    x_tiles = 2 * tile_n * din * 2
    out_tiles = 2 * tile_n * hid * 4
    weights = 2 * (din * 2 * hid * 2 + hid * hid * 2 + (2 * hid + hid + hid + hid) * 4)
    interm = 4 * tile_n * 2 * hid * 4
    est = x_tiles + out_tiles + weights + interm
    # Budget against v7x's 64 MiB physical VMEM; never below the 32 MiB default.
    return min(64 << 20, max(32 << 20, int(est * 1.5)))


@functools.partial(jax.jit, static_argnames=("tile_n",))
def ffn_forward(x, params, tile_n=512):
    """x: (batch, seq, input_dim) float32. Returns (batch, seq, hidden_dim) f32."""
    b, s, din = x.shape
    hid = params["w2"].shape[1]
    n = b * s

    # bf16 LHS for the MXU; weights already stored bf16 in params.
    x2d = x.reshape(n, din).astype(jnp.bfloat16)

    # Tile the token dim; pad N so the grid divides evenly (rows are independent).
    tile_n = min(tile_n, _round_up(n, 8))
    n_pad = _round_up(n, tile_n)
    if n_pad != n:
        x2d = jnp.pad(x2d, ((0, n_pad - n), (0, 0)))
    grid = (n_pad // tile_n,)

    x_spec = pl.BlockSpec((tile_n, din), lambda i: (i, 0))
    out_spec = pl.BlockSpec((tile_n, hid), lambda i: (i, 0))

    def resident(arr):
        # Whole-array block, same block index every step -> stays VMEM-resident.
        return pl.BlockSpec(arr.shape, lambda i: (0, 0))

    out = pl.pallas_call(
        ffn_kernel,
        out_shape=jax.ShapeDtypeStruct((n_pad, hid), jnp.float32),
        grid=grid,
        in_specs=[
            x_spec,
            resident(params["wf"]), resident(params["bf"]),
            resident(params["w2"]), resident(params["b2"]),
            resident(params["gamma"]), resident(params["beta"]),
        ],
        out_specs=out_spec,
        compiler_params=pltpu.CompilerParams(
            dimension_semantics=("parallel",),
            vmem_limit_bytes=_vmem_budget_bytes(tile_n, din, hid),
        ),
    )(x2d,
      params["wf"], params["bf"],
      params["w2"], params["b2"],
      params["gamma"], params["beta"])

    return out[:n].reshape(b, s, hid)


def make_params(key, input_dim, hidden_dim):
    ks = jax.random.split(key, 3)

    def lin(k, din, dout):
        bound = 1.0 / jnp.sqrt(din)
        kw, kb = jax.random.split(k)
        w = jax.random.uniform(kw, (din, dout), jnp.float32, -bound, bound)
        b = jax.random.uniform(kb, (1, dout), jnp.float32, -bound, bound)
        return w, b

    w1, b1 = lin(ks[0], input_dim, hidden_dim)     # fc1: Linear(input_dim, hidden_dim)
    w2, b2 = lin(ks[1], hidden_dim, hidden_dim)    # fc2: Linear(hidden_dim, hidden_dim)
    wr, br = lin(ks[2], input_dim, hidden_dim)     # res_proj (input_dim != hidden_dim)

    # Fuse [res_proj | fc1] along the output axis (shared LHS, one MXU pass).
    wf = jnp.concatenate([wr, w1], axis=1).astype(jnp.bfloat16)   # (Din, 2*hid)
    bf = jnp.concatenate([br, b1], axis=1)                        # (1, 2*hid) f32

    gamma = jnp.ones((1, hidden_dim), jnp.float32)   # LayerNorm weight
    beta = jnp.zeros((1, hidden_dim), jnp.float32)   # LayerNorm bias
    return dict(wf=wf, bf=bf,
                w2=w2.astype(jnp.bfloat16), b2=b2,
                gamma=gamma, beta=beta)


def ffn_reference(x, p):
    """Pure-JAX reference with the same bf16-input / f32-accumulate numerics."""
    b, s, din = x.shape
    hid = p["w2"].shape[1]
    x2d = x.reshape(b * s, din).astype(jnp.bfloat16)
    z = jnp.dot(x2d, p["wf"], preferred_element_type=jnp.float32) + p["bf"]
    residual = z[:, :hid]
    h = jnp.maximum(z[:, hid:], 0.0)
    h = jnp.dot(h.astype(jnp.bfloat16), p["w2"],
                preferred_element_type=jnp.float32) + p["b2"]
    y = h + residual
    mean = jnp.mean(y, axis=-1, keepdims=True)
    var = jnp.mean((y - mean) ** 2, axis=-1, keepdims=True)
    y = (y - mean) * jax.lax.rsqrt(var + 1e-5)
    return (y * p["gamma"] + p["beta"]).reshape(b, s, hid)


if __name__ == "__main__":
    batch, seq, input_dim, hidden_dim = 2, 8, 16, 32
    key = jax.random.PRNGKey(0)
    kx, kp = jax.random.split(key)

    x = jax.random.normal(kx, (batch, seq, input_dim), jnp.float32)
    params = make_params(kp, input_dim, hidden_dim)

    out = ffn_forward(x, params)
    out = jax.block_until_ready(out)

    ref = ffn_reference(x, params)
    assert out.shape == (batch, seq, hidden_dim)
    assert jnp.allclose(out, ref, atol=2e-2, rtol=2e-2)

    print("KERNEL_OK")
</pallas_src>

<mosaic_0001>
module attributes {stable_mosaic.version = 11 : i64} {
  func.func @ffn_kernel(%arg0: i32, %arg1: memref<16x16xbf16, #tpu.memory_space<vmem>>, %arg2: memref<16x64xbf16, #tpu.memory_space<vmem>>, %arg3: memref<1x64xf32, #tpu.memory_space<vmem>>, %arg4: memref<32x32xbf16, #tpu.memory_space<vmem>>, %arg5: memref<1x32xf32, #tpu.memory_space<vmem>>, %arg6: memref<1x32xf32, #tpu.memory_space<vmem>>, %arg7: memref<1x32xf32, #tpu.memory_space<vmem>>, %arg8: memref<16x32xf32, #tpu.memory_space<vmem>>) attributes {dimension_semantics = [#tpu.dimension_semantics<parallel>], iteration_bounds = array<i64: 1>, scalar_prefetch = 0 : i64, scratch_operands = 0 : i64, tpu.core_type = #tpu.core_type<tc>, window_params = [{transform_indices = @transform_0, window_bounds = array<i64: 16, 16>}, {pipeline_mode = #tpu.pipeline_mode<synchronous>, transform_indices = @transform_1, window_bounds = array<i64: 16, 64>}, {pipeline_mode = #tpu.pipeline_mode<synchronous>, transform_indices = @transform_2, window_bounds = array<i64: 1, 64>}, {pipeline_mode = #tpu.pipeline_mode<synchronous>, transform_indices = @transform_3, window_bounds = array<i64: 32, 32>}, {pipeline_mode = #tpu.pipeline_mode<synchronous>, transform_indices = @transform_4, window_bounds = array<i64: 1, 32>}, {pipeline_mode = #tpu.pipeline_mode<synchronous>, transform_indices = @transform_5, window_bounds = array<i64: 1, 32>}, {pipeline_mode = #tpu.pipeline_mode<synchronous>, transform_indices = @transform_6, window_bounds = array<i64: 1, 32>}, {transform_indices = @transform_7, window_bounds = array<i64: 16, 32>}]} {
    %c0 = arith.constant 0 : index
    %c0_0 = arith.constant 0 : index
    %0 = vector.load %arg1[%c0, %c0_0] : memref<16x16xbf16, #tpu.memory_space<vmem>>, vector<16x16xbf16>
    %c0_1 = arith.constant 0 : index
    %c0_2 = arith.constant 0 : index
    %1 = vector.load %arg2[%c0_1, %c0_2] : memref<16x64xbf16, #tpu.memory_space<vmem>>, vector<16x64xbf16>
    %cst = arith.constant dense<0.000000e+00> : vector<16x64xf32>
    %2 = tpu.matmul %0, %1, %cst {dimension_numbers = #tpu.dot_dimension_numbers<[1], [0], [0], [1], [0, 0, 1, 1], [], []>} : vector<16x16xbf16>, vector<16x64xbf16>, vector<16x64xf32> -> vector<16x64xf32>
    %c0_3 = arith.constant 0 : index
    %c0_4 = arith.constant 0 : index
    %3 = vector.load %arg3[%c0_3, %c0_4] : memref<1x64xf32, #tpu.memory_space<vmem>>, vector<1x64xf32>
    %4 = vector.broadcast %3 : vector<1x64xf32> to vector<16x64xf32>
    %5 = arith.addf %2, %4 : vector<16x64xf32>
    %6 = vector.extract_strided_slice %5 {offsets = [0, 0], sizes = [16, 32], strides = [1, 1]} : vector<16x64xf32> to vector<16x32xf32>
    %7 = vector.extract_strided_slice %5 {offsets = [0, 32], sizes = [16, 32], strides = [1, 1]} : vector<16x64xf32> to vector<16x32xf32>
    %cst_5 = arith.constant 0.000000e+00 : f32
    %8 = vector.broadcast %cst_5 : f32 to vector<16x32xf32>
    %9 = arith.maximumf %7, %8 : vector<16x32xf32>
    %10 = arith.truncf %9 : vector<16x32xf32> to vector<16x32xbf16>
    %c0_6 = arith.constant 0 : index
    %c0_7 = arith.constant 0 : index
    %11 = vector.load %arg4[%c0_6, %c0_7] : memref<32x32xbf16, #tpu.memory_space<vmem>>, vector<32x32xbf16>
    %cst_8 = arith.constant dense<0.000000e+00> : vector<16x32xf32>
    %12 = tpu.matmul %10, %11, %cst_8 {dimension_numbers = #tpu.dot_dimension_numbers<[1], [0], [0], [1], [0, 0, 1, 1], [], []>} : vector<16x32xbf16>, vector<32x32xbf16>, vector<16x32xf32> -> vector<16x32xf32>
    %c0_9 = arith.constant 0 : index
    %c0_10 = arith.constant 0 : index
    %13 = vector.load %arg5[%c0_9, %c0_10] : memref<1x32xf32, #tpu.memory_space<vmem>>, vector<1x32xf32>
    %14 = vector.broadcast %13 : vector<1x32xf32> to vector<16x32xf32>
    %15 = arith.addf %12, %14 : vector<16x32xf32>
    %16 = arith.addf %15, %6 : vector<16x32xf32>
    %cst_11 = arith.constant dense<0.000000e+00> : vector<16xf32>
    %17 = vector.multi_reduction <add>, %16, %cst_11 [1] : vector<16x32xf32> to vector<16xf32>
    %18 = vector.shape_cast %17 : vector<16xf32> to vector<16x1xf32>
    %19 = arith.mulf %16, %16 : vector<16x32xf32>
    %cst_12 = arith.constant dense<0.000000e+00> : vector<16xf32>
    %20 = vector.multi_reduction <add>, %19, %cst_12 [1] : vector<16x32xf32> to vector<16xf32>
    %21 = vector.shape_cast %20 : vector<16xf32> to vector<16x1xf32>
    %cst_13 = arith.constant 3.125000e-02 : f32
    %22 = vector.broadcast %cst_13 : f32 to vector<16x1xf32>
    %23 = arith.mulf %18, %22 : vector<16x1xf32>
    %cst_14 = arith.constant 3.125000e-02 : f32
    %24 = vector.broadcast %cst_14 : f32 to vector<16x1xf32>
    %25 = arith.mulf %21, %24 : vector<16x1xf32>
    %26 = arith.mulf %23, %23 : vector<16x1xf32>
    %27 = arith.subf %25, %26 : vector<16x1xf32>
    %28 = vector.broadcast %23 : vector<16x1xf32> to vector<16x32xf32>
    %29 = arith.subf %16, %28 : vector<16x32xf32>
    %cst_15 = arith.constant 9.99999974E-6 : f32
    %30 = vector.broadcast %cst_15 : f32 to vector<16x1xf32>
    %31 = arith.addf %27, %30 : vector<16x1xf32>
    %32 = math.rsqrt %31 : vector<16x1xf32>
    %33 = vector.broadcast %32 : vector<16x1xf32> to vector<16x32xf32>
    %34 = arith.mulf %29, %33 : vector<16x32xf32>
    %c0_16 = arith.constant 0 : index
    %c0_17 = arith.constant 0 : index
    %35 = vector.load %arg6[%c0_16, %c0_17] : memref<1x32xf32, #tpu.memory_space<vmem>>, vector<1x32xf32>
    %36 = vector.broadcast %35 : vector<1x32xf32> to vector<16x32xf32>
    %37 = arith.mulf %34, %36 : vector<16x32xf32>
    %c0_18 = arith.constant 0 : index
    %c0_19 = arith.constant 0 : index
    %38 = vector.load %arg7[%c0_18, %c0_19] : memref<1x32xf32, #tpu.memory_space<vmem>>, vector<1x32xf32>
    %39 = vector.broadcast %38 : vector<1x32xf32> to vector<16x32xf32>
    %40 = arith.addf %37, %39 : vector<16x32xf32>
    %c0_20 = arith.constant 0 : index
    %c0_21 = arith.constant 0 : index
    %41 = vector.load %arg8[%c0_20, %c0_21] : memref<16x32xf32, #tpu.memory_space<vmem>>, vector<16x32xf32>
    tpu.vector_store %arg8[%c0_20, %c0_21], %40 {strides = array<i32>} : memref<16x32xf32, #tpu.memory_space<vmem>>, vector<16x32xf32>,
    return
  }
  func.func @transform_0(%arg0: i32) -> (i32, i32) {
    %c0_i32 = arith.constant 0 : i32
    %c0_i32_0 = arith.constant 0 : i32
    return %arg0, %c0_i32 : i32, i32
  }
  func.func @transform_1(%arg0: i32) -> (i32, i32) {
    %c0_i32 = arith.constant 0 : i32
    %c0_i32_0 = arith.constant 0 : i32
    %c0_i32_1 = arith.constant 0 : i32
    return %c0_i32, %c0_i32_0 : i32, i32
  }
  func.func @transform_2(%arg0: i32) -> (i32, i32) {
    %c0_i32 = arith.constant 0 : i32
    %c0_i32_0 = arith.constant 0 : i32
    %c0_i32_1 = arith.constant 0 : i32
    return %c0_i32, %c0_i32_0 : i32, i32
  }
  func.func @transform_3(%arg0: i32) -> (i32, i32) {
    %c0_i32 = arith.constant 0 : i32
    %c0_i32_0 = arith.constant 0 : i32
    %c0_i32_1 = arith.constant 0 : i32
    return %c0_i32, %c0_i32_0 : i32, i32
  }
  func.func @transform_4(%arg0: i32) -> (i32, i32) {
    %c0_i32 = arith.constant 0 : i32
    %c0_i32_0 = arith.constant 0 : i32
    %c0_i32_1 = arith.constant 0 : i32
    return %c0_i32, %c0_i32_0 : i32, i32
  }
  func.func @transform_5(%arg0: i32) -> (i32, i32) {
    %c0_i32 = arith.constant 0 : i32
    %c0_i32_0 = arith.constant 0 : i32
    %c0_i32_1 = arith.constant 0 : i32
    return %c0_i32, %c0_i32_0 : i32, i32
  }
  func.func @transform_6(%arg0: i32) -> (i32, i32) {
    %c0_i32 = arith.constant 0 : i32
    %c0_i32_0 = arith.constant 0 : i32
    %c0_i32_1 = arith.constant 0 : i32
    return %c0_i32, %c0_i32_0 : i32, i32
  }
  func.func @transform_7(%arg0: i32) -> (i32, i32) {
    %c0_i32 = arith.constant 0 : i32
    %c0_i32_0 = arith.constant 0 : i32
    return %arg0, %c0_i32 : i32, i32
  }
}

</mosaic_0001>

<llo_original>
// kernel: ffn_forward.1
$region0: #{ffn_forward.1}
  #allocation0 [shape = 'u32[]', space=smem, size = 0x4, offset = 0x4, fixed_abs, tag = 'smem constant byte address 0x4 - core index']
  #allocation1 [shape = 'u32[72,128]{1,0:T(1,128)}', space=vmem, size = 0x9000, scoped, tag = 'internal scratch']
  %s0 = inlined_call_operand.vmem [shape: bf16[16,16], index: 0, kind: input, shape index: {}]
  %s1 = inlined_call_operand.vmem [shape: bf16[16,64], index: 1, kind: input, shape index: {}]
  %s2 = inlined_call_operand.vmem [shape: f32[1,64], index: 2, kind: input, shape index: {}]
  %s3 = inlined_call_operand.vmem [shape: bf16[32,32], index: 3, kind: input, shape index: {}]
  %s4 = inlined_call_operand.vmem [shape: f32[1,32], index: 4, kind: input, shape index: {}]
  %s5 = inlined_call_operand.vmem [shape: f32[1,32], index: 5, kind: input, shape index: {}]
  %s6 = inlined_call_operand.vmem [shape: f32[1,32], index: 6, kind: input, shape index: {}]
  %s7 = inlined_call_operand.hbm [shape: f32[16,32], index: 7, kind: output, shape index: {}]
  %s8 = sld [smem:[#allocation0]]
  $region38: #{ffn_forward.1} parent=0
    _
  %s10 = ssub.s32 1, %s8
  %s11 = scalar_select 0, %s10, %s8
  $region1: #{ffn_forward.1} parent=0
    #allocation2 [shape = 'u8[8192]{0}', space=vmem, size = 0x2000, scoped, tag = 'output window, operand 0, single buffered']
    #allocation3 [shape = 's32[1]{0}', space=sflag, size = 0x4, scoped, tag = 'scoped memory for ffn_forward.1']
    %12 = vsyncpa [#allocation3], 0
    // Predicated region
    $region2: #{ffn_forward.1} parent=1 // pred_check
      _
    $region3: #{ffn_forward.1} parent=1 // pred_check_branch
      %14 = sbr.rel (0) target = $region5
    $region4: #{ffn_forward.1} parent=1 // pred_region
      _
    $region5: #{ffn_forward.1} parent=1 // pred_fallthru
      _
    // Predicated region
    $region6: #{ffn_forward.1} parent=1 // pred_check
      _
    $region7: #{ffn_forward.1} parent=1 // pred_check_branch
      %16 = sbr.rel (0) target = $region9
    $region8: #{ffn_forward.1} parent=1 // pred_region
      _
    $region9: #{ffn_forward.1} parent=1 // pred_fallthru
      _
    // Predicated region
    $region10: #{ffn_forward.1} parent=1 // pred_check
      _
    $region11: #{ffn_forward.1} parent=1 // pred_check_branch
      %18 = sbr.rel (0) target = $region13
    $region12: #{ffn_forward.1} parent=1 // pred_region
      _
    $region13: #{ffn_forward.1} parent=1 // pred_fallthru
      _
    // Predicated region
    $region14: #{ffn_forward.1} parent=1 // pred_check
      _
    $region15: #{ffn_forward.1} parent=1 // pred_check_branch
      %20 = sbr.rel (0) target = $region17
    $region16: #{ffn_forward.1} parent=1 // pred_region
      _
    $region17: #{ffn_forward.1} parent=1 // pred_fallthru
      _
    // Predicated region
    $region18: #{ffn_forward.1} parent=1 // pred_check
      _
    $region19: #{ffn_forward.1} parent=1 // pred_check_branch
      %22 = sbr.rel (0) target = $region21
    $region20: #{ffn_forward.1} parent=1 // pred_region
      _
    $region21: #{ffn_forward.1} parent=1 // pred_fallthru
      _
    // Predicated region
    $region22: #{ffn_forward.1} parent=1 // pred_check
      _
    $region23: #{ffn_forward.1} parent=1 // pred_check_branch
      %24 = sbr.rel (0) target = $region25
    $region24: #{ffn_forward.1} parent=1 // pred_region
      _
    $region25: #{ffn_forward.1} parent=1 // pred_fallthru
      _
    // Predicated region
    $region26: #{ffn_forward.1} parent=1 // pred_check
      _
    $region27: #{ffn_forward.1} parent=1 // pred_check_branch
      %26 = sbr.rel (0) target = $region29
    $region28: #{ffn_forward.1} parent=1 // pred_region
      _
    $region29: #{ffn_forward.1} parent=1 // pred_fallthru
      _
    %v28 = vld [vmem:[%s0] sm:$0xf]
    %v29 = vld [vmem:[%s0 + $0x4] sm:$0xf]
    %v30 = vld [vmem:[%s1] sm:$0xf]
    %v31 = vld [vmem:[%s1 + $0x4] sm:$0xf]
    %v32 = vld [vmem:[%s2] sm:$0x1]
    %v34 = vperm.slane %v32, 0
    %v38 = vunpack.c.l.b16 %v28
    %v39 = vunpack.c.l.b16 %v29
    %v40 = vpack.c.b16 %v39, %v38
    %v43 = vunpack.c.l.b16 %v30
    %v44 = vunpack.c.l.b16 %v31
    %v45 = vpack.c.b16 %v44, %v43
    %vm47 = vcmask 130048
    %v49 = vsel %vm47, %v40, 0
    %51 = vmatpush.bf16.msra.mxu0 0
    %52 = vmatpush.bf16.msra.mxu0 0
    %53 = vmatpush.bf16.msra.mxu0 0
    %54 = vmatpush.bf16.msra.mxu0 0
    %55 = vmatpush.bf16.msra.mxu0 0
    %56 = vmatpush.bf16.msra.mxu0 0
    %57 = vmatpush.bf16.msra.mxu0 0
    %58 = vmatpush.bf16.msra.mxu0 %v45
    %59 = vmatmul.bf16.gmra.mxu0 %v49
    %v60 = vpop.f32.mrf.mxu0
    %v61 = vadd.f32 %v34, %v60
    %v62 = vpop.f32.mrf.mxu0
    %v63 = vadd.f32 %v34, %v62
    %64 = vdwg.mxu0
    %v65 = vmax.f32 %v61, 0.0
    %v66 = vmax.f32 %v63, 0.0
    %v67 = vpack.c.bf16 %v66, %v65
    %v68 = vld [vmem:[%s3] sm:$0xf]
    %v69 = vld [vmem:[%s3 + $0x4] sm:$0xf]
    %v70 = vld [vmem:[%s3 + $0x8] sm:$0xf]
    %v71 = vld [vmem:[%s3 + $0xc] sm:$0xf]
    %v72 = vld [vmem:[%s4] sm:$0x1]
    %v74 = vperm.slane %v72, 0
    %77 = vrot.lane.b32.xlu0 %v67, 96
    %v78 = vpop.permute.xlu0 %77
    %v83 = vunpack.c.l.b16 %v68
    %v84 = vunpack.c.l.b16 %v69
    %v85 = vunpack.c.l.b16 %v70
    %v86 = vunpack.c.l.b16 %v71
    %v87 = vpack.c.b16 %v84, %v83
    %v88 = vpack.c.b16 %v86, %v85
    %vm91 = vcmask 261120
    %v93 = vsel %vm91, %v78, 0
    %95 = vmatpush.bf16.msra.mxu0 0
    %96 = vmatpush.bf16.msra.mxu0 0
    %97 = vmatpush.bf16.msra.mxu0 0
    %98 = vmatpush.bf16.msra.mxu0 0
    %99 = vmatpush.bf16.msra.mxu0 0
    %100 = vmatpush.bf16.msra.mxu0 0
    %101 = vmatpush.bf16.msra.mxu0 %v88
    %102 = vmatpush.bf16.msra.mxu0 %v87
    %103 = vmatmul.bf16.gmra.mxu0 %v93
    %v104 = vpop.f32.mrf.mxu0
    %v105 = vadd.f32 %v74, %v104
    %v106 = vpop.f32.mrf.mxu0
    %v107 = vadd.f32 %v74, %v106
    %108 = vdwg.mxu0
    %v109 = vadd.f32 %v105, %v61
    %v110 = vadd.f32 %v107, %v63
    %v111 = vsel %vm91, %v109, 0.0
    %112 = vadd.xlane.f32.xlu0 %v111
    %v113 = vpop.xlane.xlu0 %112
    %v114 = vsel %vm91, %v110, 0.0
    %115 = vadd.xlane.f32.xlu0 %v114
    %v116 = vpop.xlane.xlu0 %115
    %v117 = vmul.f32 %v109, %v109
    %v118 = vmul.f32 %v110, %v110
    %v119 = vsel %vm91, %v117, 0.0
    %120 = vadd.xlane.f32.xlu0 %v119
    %v121 = vpop.xlane.xlu0 %120
    %v122 = vsel %vm91, %v118, 0.0
    %123 = vadd.xlane.f32.xlu0 %v122
    %v124 = vpop.xlane.xlu0 %123
    %v125 = vmul.f32 %v113, 0.03125
    %v126 = vmul.f32 %v116, 0.03125
    %v127 = vmul.f32 %v121, 0.03125
    %v128 = vmul.f32 %v124, 0.03125
    %v129 = vmul.f32 %v125, %v125
    %v130 = vmul.f32 %v126, %v126
    %v131 = vsub.f32 %v127, %v129
    %v132 = vsub.f32 %v128, %v130
    %v133 = vsub.f32 %v109, %v125
    %v134 = vsub.f32 %v110, %v126
    %v135 = vadd.f32 %v131, 1e-05
    %v136 = vadd.f32 %v132, 1e-05
    %v137 = vrsqrt.pop %v135
    %v138 = vmul.f32 %v137, %v135
    %v139 = vmul.f32 %v138, %v137
    %v140 = vmul.f32 0.5, %v139
    %v141 = vsub.f32 1.5, %v140
    %v142 = vmul.f32 %v137, %v141
    %vm143 = vweird.f32 %v135
    %vm144 = vweird.f32 %v137
    %vm145 = vmor %vm143, %vm144
    %v146 = vsel %vm145, %v137, %v142
    %v147 = vrsqrt.pop %v136
    %v148 = vmul.f32 %v147, %v136
    %v149 = vmul.f32 %v148, %v147
    %v150 = vmul.f32 0.5, %v149
    %v151 = vsub.f32 1.5, %v150
    %v152 = vmul.f32 %v147, %v151
    %vm153 = vweird.f32 %v136
    %vm154 = vweird.f32 %v147
    %vm155 = vmor %vm153, %vm154
    %v156 = vsel %vm155, %v147, %v152
    %v157 = vmul.f32 %v133, %v146
    %v158 = vmul.f32 %v134, %v156
    %v159 = vld [vmem:[%s5] sm:$0x1]
    %v161 = vperm.slane %v159, 0
    %v163 = vmul.f32 %v157, %v161
    %v164 = vmul.f32 %v158, %v161
    %v165 = vld [vmem:[%s6] sm:$0x1]
    %v167 = vperm.slane %v165, 0
    %v169 = vadd.f32 %v163, %v167
    %v170 = vadd.f32 %v164, %v167
    %171 = vst.msk [vmem:[#allocation2] sm:$0xff] %vm91, %v169
    %172 = vst.msk [vmem:[#allocation2 + $0x8] sm:$0xff] %vm91, %v170
    // Predicated region
    $region30: #{ffn_forward.1} parent=1 // pred_check
      _
    $region31: #{ffn_forward.1} parent=1 // pred_check_branch
      %174 = sbr.rel (0) target = $region33
    $region32: #{ffn_forward.1} parent=1 // pred_region
      %176 = vsyncadd [#allocation3], 0
      %s177 = sshll.u32 [#allocation2], 4
      %s178 = int_to_ptr.vmem [resolvable:$true] %s177
      %s179 = sshll.u32 %s7, 4
      %s180 = int_to_ptr.hbm [resolvable:$true] %s179
      %185 = dma.vmem_to_hbm [thread:$0]  %s178, 256, %s180, [#allocation3], 128, 128, 8
    $region33: #{ffn_forward.1} parent=1 // pred_fallthru
      _
    // Predicated region
    $region34: #{ffn_forward.1} parent=1 // pred_check
      _
    $region35: #{ffn_forward.1} parent=1 // pred_check_branch
      %187 = sbr.rel (0) target = $region37
    $region36: #{ffn_forward.1} parent=1 // pred_region
      %189 = dma.done [#allocation3], 256
    $region37: #{ffn_forward.1} parent=1 // pred_fallthru
      _
    %190 = vsyncpa [#allocation3], 1

</llo_original>
